<compile_context>
chip_gen: v7x
topology: tpu7x:2x2x1
jax: 0.10.0
libtpu: 0.0.40
codegen_flags: <defaults>
</compile_context>

<pallas_src>
import functools

import jax
import jax.numpy as jnp
from jax import lax
from jax.experimental import pallas as pl
from jax.experimental.pallas import tpu as pltpu


def _round_up(x, m):
    return ((x + m - 1) // m) * m


# ---------------------------------------------------------------------------
# Fused kernel:  raw logits (x @ W_eff) + per-row BN partial statistics.
# The per-row sum / sum-of-squares are packed into two spare lanes (columns
# num_classes and num_classes+1) of the lane-padded output tile, so the store
# stays one unmasked full-width vst and the grid axis has no accumulator
# (fully parallel).  Rows beyond N (ragged last tile) are write-masked by
# Pallas and never reach HBM.
# ---------------------------------------------------------------------------
def logreg_fused_kernel(x_ref, w_ref, out_ref, *, num_classes):
    x = x_ref[...]                                            # (blk, D) f32
    logits = jnp.dot(x.astype(w_ref.dtype), w_ref[...],
                     preferred_element_type=jnp.float32)      # (blk, C_pad)
    # Dropout(p=0.0) is the identity.
    # TODO(synk): if p_input > 0 were ever used, add pltpu.prng_* masking here.
    row_sum = jnp.sum(x, axis=1, keepdims=True)               # (blk, 1)
    row_sq = jnp.sum(x * x, axis=1, keepdims=True)            # (blk, 1)
    lane = lax.broadcasted_iota(jnp.int32, logits.shape, 1)
    out = jnp.where(lane == num_classes, row_sum, logits)
    out = jnp.where(lane == num_classes + 1, row_sq, out)
    out_ref[...] = out.astype(out_ref.dtype)


def logistic_regressor_forward(x_nchw, params, *, block_n=4096,
                               compute_dtype=jnp.float32,
                               out_dtype=jnp.float32):
    """LogisticRegressor forward via one fused Pallas TPU pass over x.

    block_n:       batch tile.  4096 keeps the double-buffered footprint at
                   ~8 MB (fits every generation's scoped-VMEM default); raise
                   on v7x only with an explicit vmem_limit_bytes.
    compute_dtype: matmul operand dtype (f32 default; bf16 is only useful if
                   x itself is staged as bf16 in HBM — memory-bound kernel).
    out_dtype:     raw-logits dtype written to HBM (bf16 halves write traffic
                   at scale; f32 default for tight numerical tolerance).
    """
    N, C_in, H, W = x_nchw.shape
    assert C_in == 1, "BatchNorm2d(1) implies a single input channel"
    D = H * W
    C = params["w_fc"].shape[1]

    # ---- one-time parameter preprocessing (model is linear after BN) -------
    # W_eff[k*W+w, c] = sum_h A[h,k] * w_fc[h*W+w, c]
    wfc_r = params["w_fc"].astype(jnp.float32).reshape(H, W, C)
    A = params["A"].astype(jnp.float32)
    w_eff = jnp.einsum("hk,hwc->kwc", A, wfc_r).reshape(D, C)
    b_sa_term = jnp.einsum("h,hwc->c",
                           params["b_sa"].astype(jnp.float32)[:, 0], wfc_r)
    base_term = params["baseline"].astype(jnp.float32).reshape(1, D) @ w_eff
    b_eff = b_sa_term[None, :] + params["b_fc"].astype(jnp.float32) - base_term
    colsum_w = jnp.sum(w_eff, axis=0)                          # (C,)

    # Lane-pad the class dim to a full 128-lane vreg (unmasked output stores)
    # and reserve 2 spare lanes for the per-row BN statistics.
    C_pad = _round_up(C + 2, 128)
    w_pad = jnp.pad(w_eff, ((0, 0), (0, C_pad - C))).astype(compute_dtype)

    # ---- lane-dense activations (N, H*W); no batch padding for large N -----
    x = x_nchw.reshape(N, D).astype(jnp.float32)
    n_blk = max(8, min(block_n, _round_up(N, 8)))
    if n_blk > N:                      # only for tiny batches: pad <= 7 rows
        x = jnp.pad(x, ((0, n_blk - N), (0, 0)))
    nb = pl.cdiv(N, n_blk)

    raw = pl.pallas_call(
        functools.partial(logreg_fused_kernel, num_classes=C),
        out_shape=jax.ShapeDtypeStruct((N, C_pad), out_dtype),
        grid=(nb,),
        in_specs=[
            pl.BlockSpec((n_blk, D), lambda b: (b, 0)),        # x tile
            pl.BlockSpec((D, C_pad), lambda b: (0, 0)),        # W_eff (resident)
        ],
        out_specs=pl.BlockSpec((n_blk, C_pad), lambda b: (b, 0)),
        compiler_params=pltpu.CompilerParams(
            dimension_semantics=("parallel",)),
        # TODO(synk): on v7x, try CORE_PARALLEL on the batch axis and verify
        # both TensorCores are active in the trace.
    )(x, w_pad)

    # ---- tiny fused epilogue: global BN stats + affine + bias + slice ------
    raw = raw.astype(jnp.float32)
    count = jnp.float32(N * H * W)
    mean = jnp.sum(raw[:, C]) / count
    var = jnp.maximum(jnp.sum(raw[:, C + 1]) / count - mean * mean, 0.0)
    scale = params["gamma"] * lax.rsqrt(var + params["eps"])
    shift = params["beta"] - mean * scale
    return scale * raw[:, :C] + (shift * colsum_w[None, :] + b_eff)


def reference_forward(x_nchw, params):
    # Pure-JAX reference matching the PyTorch forward (training-mode BN).
    N = x_nchw.shape[0]
    x = x_nchw[:, 0].astype(jnp.float32)
    mean = jnp.mean(x)
    var = jnp.mean((x - mean) ** 2)
    y = (x - mean) / jnp.sqrt(var + params["eps"]) * params["gamma"] \
        + params["beta"]
    y = y - params["baseline"][None]
    z = jnp.einsum("hk,nkw->nhw", params["A"], y) + params["b_sa"][None]
    flat = z.reshape(N, -1)
    return flat @ params["w_fc"] + params["b_fc"]


if __name__ == "__main__":
    # Module config (consistent with the forward pass):
    num_classes = 8
    input_shape = (8, 16)          # (H, W)
    H, W = input_shape
    channels = H * W               # = 128, flattened feature size fed to fc
    batch = 2

    key = jax.random.PRNGKey(0)
    k_x, k_a, k_bsa, k_wfc, k_bfc = jax.random.split(key, 5)

    x = jax.random.normal(k_x, (batch, 1, H, W), dtype=jnp.float32)

    params = {
        "gamma": 1.0,              # BatchNorm2d default affine init
        "beta": 0.0,
        "eps": 1e-5,
        "baseline": jnp.zeros((H, W), dtype=jnp.float32),   # zeros, as in __init__
        "A": jax.random.normal(k_a, (H, H), dtype=jnp.float32) * 0.1,
        "b_sa": jax.random.normal(k_bsa, (H, 1), dtype=jnp.float32) * 0.1,
        "w_fc": jax.random.normal(k_wfc, (channels, num_classes),
                                  dtype=jnp.float32) * (1.0 / channels) ** 0.5,
        "b_fc": jax.random.normal(k_bfc, (1, num_classes),
                                  dtype=jnp.float32) * 0.01,
    }

    out = logistic_regressor_forward(x, params)
    out = jax.block_until_ready(out)

    ref = reference_forward(x, params)
    assert out.shape == (batch, num_classes)
    assert jnp.allclose(out, ref, atol=1e-4, rtol=1e-4), "mismatch vs reference"

    print("KERNEL_OK")
</pallas_src>

<mosaic_0001>
module attributes {stable_mosaic.version = 11 : i64} {
  func.func @logreg_fused_kernel(%arg0: i32, %arg1: memref<8x128xf32, #tpu.memory_space<vmem>>, %arg2: memref<128x128xf32, #tpu.memory_space<vmem>>, %arg3: memref<8x128xf32, #tpu.memory_space<vmem>>) attributes {dimension_semantics = [#tpu.dimension_semantics<parallel>], iteration_bounds = array<i64: 1>, scalar_prefetch = 0 : i64, scratch_operands = 0 : i64, tpu.core_type = #tpu.core_type<tc>, window_params = [{transform_indices = @transform_0, window_bounds = array<i64: 8, 128>}, {pipeline_mode = #tpu.pipeline_mode<synchronous>, transform_indices = @transform_1, window_bounds = array<i64: 128, 128>}, {transform_indices = @transform_2, window_bounds = array<i64: 8, 128>}]} {
    %c0 = arith.constant 0 : index
    %c0_0 = arith.constant 0 : index
    %0 = vector.load %arg1[%c0, %c0_0] : memref<8x128xf32, #tpu.memory_space<vmem>>, vector<8x128xf32>
    %c0_1 = arith.constant 0 : index
    %c0_2 = arith.constant 0 : index
    %1 = vector.load %arg2[%c0_1, %c0_2] : memref<128x128xf32, #tpu.memory_space<vmem>>, vector<128x128xf32>
    %cst = arith.constant dense<0.000000e+00> : vector<8x128xf32>
    %2 = tpu.matmul %0, %1, %cst {dimension_numbers = #tpu.dot_dimension_numbers<[1], [0], [0], [1], [0, 0, 1, 1], [], []>} : vector<8x128xf32>, vector<128x128xf32>, vector<8x128xf32> -> vector<8x128xf32>
    %cst_3 = arith.constant dense<0.000000e+00> : vector<8xf32>
    %3 = vector.multi_reduction <add>, %0, %cst_3 [1] : vector<8x128xf32> to vector<8xf32>
    %4 = vector.shape_cast %3 : vector<8xf32> to vector<8x1xf32>
    %5 = arith.mulf %0, %0 : vector<8x128xf32>
    %cst_4 = arith.constant dense<0.000000e+00> : vector<8xf32>
    %6 = vector.multi_reduction <add>, %5, %cst_4 [1] : vector<8x128xf32> to vector<8xf32>
    %7 = vector.shape_cast %6 : vector<8xf32> to vector<8x1xf32>
    %8 = tpu.iota {dimensions = array<i32: 1>} : vector<8x128xi32>
    %c8_i32 = arith.constant 8 : i32
    %9 = vector.broadcast %c8_i32 : i32 to vector<8x128xi32>
    %10 = arith.cmpi eq, %8, %9 : vector<8x128xi32>
    %11 = vector.shape_cast %4 : vector<8x1xf32> to vector<8x1xf32>
    %12 = vector.broadcast %11 : vector<8x1xf32> to vector<8x128xf32>
    %13 = arith.select %10, %12, %2 : vector<8x128xi1>, vector<8x128xf32>
    %c9_i32 = arith.constant 9 : i32
    %14 = vector.broadcast %c9_i32 : i32 to vector<8x128xi32>
    %15 = arith.cmpi eq, %8, %14 : vector<8x128xi32>
    %16 = vector.shape_cast %7 : vector<8x1xf32> to vector<8x1xf32>
    %17 = vector.broadcast %16 : vector<8x1xf32> to vector<8x128xf32>
    %18 = arith.select %15, %17, %13 : vector<8x128xi1>, vector<8x128xf32>
    %c0_5 = arith.constant 0 : index
    %c0_6 = arith.constant 0 : index
    %19 = vector.load %arg3[%c0_5, %c0_6] : memref<8x128xf32, #tpu.memory_space<vmem>>, vector<8x128xf32>
    tpu.vector_store %arg3[%c0_5, %c0_6], %18 {strides = array<i32>} : memref<8x128xf32, #tpu.memory_space<vmem>>, vector<8x128xf32>,
    return
  }
  func.func @transform_0(%arg0: i32) -> (i32, i32) {
    %c0_i32 = arith.constant 0 : i32
    %c0_i32_0 = arith.constant 0 : i32
    return %arg0, %c0_i32 : i32, i32
  }
  func.func @transform_1(%arg0: i32) -> (i32, i32) {
    %c0_i32 = arith.constant 0 : i32
    %c0_i32_0 = arith.constant 0 : i32
    %c0_i32_1 = arith.constant 0 : i32
    return %c0_i32, %c0_i32_0 : i32, i32
  }
  func.func @transform_2(%arg0: i32) -> (i32, i32) {
    %c0_i32 = arith.constant 0 : i32
    %c0_i32_0 = arith.constant 0 : i32
    return %arg0, %c0_i32 : i32, i32
  }
}

</mosaic_0001>

<llo_original>
// kernel: tpu_custom_call.1
$region0: #{tpu_custom_call.1}
  #allocation0 [shape = 'u32[]', space=smem, size = 0x4, offset = 0x4, fixed_abs, tag = 'smem constant byte address 0x4 - core index']
  #allocation1 [shape = 'u32[144,128]{1,0:T(1,128)}', space=vmem, size = 0x12000, scoped, tag = 'internal scratch']
  %s0 = inlined_call_operand.hbm [shape: f32[8,128], index: 0, kind: input, shape index: {}]
  %s1 = inlined_call_operand.hbm [shape: f32[128,128], index: 1, kind: input, shape index: {}]
  %s2 = inlined_call_operand.hbm [shape: f32[2,128], index: 2, kind: output, shape index: {}]
  %s3 = sld [smem:[#allocation0]]
  $region26: #{tpu_custom_call.1} parent=0
    _
  %s5 = ssub.s32 1, %s3
  %s6 = scalar_select 0, %s5, %s3
  $region1: #{tpu_custom_call.1} parent=0
    #allocation2 [shape = 'u8[4096]{0}', space=vmem, size = 0x1000, scoped, tag = 'input window, operand 0, single buffered']
    #allocation3 [shape = 's32[1]{0}', space=sflag, size = 0x4, scoped, tag = 'scoped memory for tpu_custom_call.1']
    #allocation4 [shape = 's32[1]{0}', space=sflag, size = 0x4, scoped, tag = 'scoped memory for tpu_custom_call.1']
    #allocation5 [shape = 'u8[65536]{0}', space=vmem, size = 0x10000, scoped, tag = 'input window, operand 1, single buffered']
    #allocation6 [shape = 's32[1]{0}', space=sflag, size = 0x4, scoped, tag = 'scoped memory for tpu_custom_call.1']
    #allocation7 [shape = 'u8[4096]{0}', space=vmem, size = 0x1000, scoped, tag = 'output window, operand 0, single buffered']
    %7 = vsyncpa [#allocation3], 0
    %8 = vsyncpa [#allocation6], 0
    %9 = vsyncpa [#allocation4], 0
    // Predicated region
    $region2: #{tpu_custom_call.1} parent=1 // pred_check
      _
    $region3: #{tpu_custom_call.1} parent=1 // pred_check_branch
      %11 = sbr.rel (0) target = $region5
    $region4: #{tpu_custom_call.1} parent=1 // pred_region
      %s13 = ssub.s32 128, 128
      %14 = vsyncadd [#allocation3], %s13
      %s16 = sshll.u32 [#allocation2], 4
      %s17 = int_to_ptr.vmem [resolvable:$true] %s16
      %19 = dma.hbm_to_vmem [thread:$0]  %s0, 128, %s17, [#allocation3]
    $region5: #{tpu_custom_call.1} parent=1 // pred_fallthru
      _
    // Predicated region
    $region6: #{tpu_custom_call.1} parent=1 // pred_check
      _
    $region7: #{tpu_custom_call.1} parent=1 // pred_check_branch
      %21 = sbr.rel (0) target = $region9
    $region8: #{tpu_custom_call.1} parent=1 // pred_region
      %s23 = ssub.s32 2048, 2048
      %24 = vsyncadd [#allocation6], %s23
      %s25 = sshll.u32 [#allocation5], 4
      %s26 = int_to_ptr.vmem [resolvable:$true] %s25
      %31 = dma.hbm_to_vmem [thread:$0]  %s1, 2048, %s26, [#allocation6], 128, 128, 8
    $region9: #{tpu_custom_call.1} parent=1 // pred_fallthru
      _
    // Predicated region
    $region10: #{tpu_custom_call.1} parent=1 // pred_check
      _
    $region11: #{tpu_custom_call.1} parent=1 // pred_check_branch
      %33 = sbr.rel (0) target = $region13
    $region12: #{tpu_custom_call.1} parent=1 // pred_region
      %34 = dma.done [#allocation3], 128
    $region13: #{tpu_custom_call.1} parent=1 // pred_fallthru
      _
    // Predicated region
    $region14: #{tpu_custom_call.1} parent=1 // pred_check
      _
    $region15: #{tpu_custom_call.1} parent=1 // pred_check_branch
      %36 = sbr.rel (0) target = $region17
    $region16: #{tpu_custom_call.1} parent=1 // pred_region
      %37 = dma.done [#allocation6], 2048
    $region17: #{tpu_custom_call.1} parent=1 // pred_fallthru
      _
    %v38 = vld [vmem:[#allocation2] sm:$0xff]
    %v39 = vld [vmem:[#allocation5] sm:$0xff]
    %v40 = vld [vmem:[#allocation5 + $0x8] sm:$0xff]
    %v41 = vld [vmem:[#allocation5 + $0x10] sm:$0xff]
    %v42 = vld [vmem:[#allocation5 + $0x18] sm:$0xff]
    %v43 = vld [vmem:[#allocation5 + $0x20] sm:$0xff]
    %v44 = vld [vmem:[#allocation5 + $0x28] sm:$0xff]
    %v45 = vld [vmem:[#allocation5 + $0x30] sm:$0xff]
    %v46 = vld [vmem:[#allocation5 + $0x38] sm:$0xff]
    %v47 = vld [vmem:[#allocation5 + $0x40] sm:$0xff]
    %v48 = vld [vmem:[#allocation5 + $0x48] sm:$0xff]
    %v49 = vld [vmem:[#allocation5 + $0x50] sm:$0xff]
    %v50 = vld [vmem:[#allocation5 + $0x58] sm:$0xff]
    %v51 = vld [vmem:[#allocation5 + $0x60] sm:$0xff]
    %v52 = vld [vmem:[#allocation5 + $0x68] sm:$0xff]
    %v53 = vld [vmem:[#allocation5 + $0x70] sm:$0xff]
    %v54 = vld [vmem:[#allocation5 + $0x78] sm:$0xff]
    %55 = vmatprep.subr.mxu0 0.0
    %56 = vmatpush1.msra.mxu0 %v39
    %57 = vmatprep.subr.mxu0 0.0
    %58 = vmatpush1.msra.mxu0 %v40
    %59 = vmatprep.subr.mxu0 0.0
    %60 = vmatpush1.msra.mxu0 %v41
    %61 = vmatprep.subr.mxu0 0.0
    %62 = vmatpush1.msra.mxu0 %v42
    %63 = vmatprep.subr.mxu0 0.0
    %64 = vmatpush1.msra.mxu0 %v43
    %65 = vmatprep.subr.mxu0 0.0
    %66 = vmatpush1.msra.mxu0 %v44
    %67 = vmatprep.subr.mxu0 0.0
    %68 = vmatpush1.msra.mxu0 %v45
    %69 = vmatprep.subr.mxu0 0.0
    %70 = vmatpush1.msra.mxu0 %v46
    %71 = vmatprep.subr.mxu0 0.0
    %72 = vmatpush1.msra.mxu0 %v47
    %73 = vmatprep.subr.mxu0 0.0
    %74 = vmatpush1.msra.mxu0 %v48
    %75 = vmatprep.subr.mxu0 0.0
    %76 = vmatpush1.msra.mxu0 %v49
    %77 = vmatprep.subr.mxu0 0.0
    %78 = vmatpush1.msra.mxu0 %v50
    %79 = vmatprep.subr.mxu0 0.0
    %80 = vmatpush1.msra.mxu0 %v51
    %81 = vmatprep.subr.mxu0 0.0
    %82 = vmatpush1.msra.mxu0 %v52
    %83 = vmatprep.subr.mxu0 0.0
    %84 = vmatpush1.msra.mxu0 %v53
    %85 = vmatprep.subr.mxu0 0.0
    %86 = vmatpush1.msra.mxu0 %v54
    %87 = vmatprep.subr.mxu0 0.0
    %88 = vmatpush1.msra.mxu0 0.0
    %89 = vmatprep.subr.mxu0 0.0
    %90 = vmatpush1.msra.mxu0 0.0
    %91 = vmatprep.subr.mxu0 0.0
    %92 = vmatpush1.msra.mxu0 0.0
    %93 = vmatprep.subr.mxu0 0.0
    %94 = vmatpush1.msra.mxu0 0.0
    %95 = vmatprep.subr.mxu0 0.0
    %96 = vmatpush1.msra.mxu0 0.0
    %97 = vmatprep.subr.mxu0 0.0
    %98 = vmatpush1.msra.mxu0 0.0
    %99 = vmatprep.subr.mxu0 0.0
    %100 = vmatpush1.msra.mxu0 0.0
    %101 = vmatprep.subr.mxu0 0.0
    %102 = vmatpush1.msra.mxu0 0.0
    %103 = vmatprep.subr.mxu0 0.0
    %104 = vmatpush1.msra.mxu0 0.0
    %105 = vmatprep.subr.mxu0 0.0
    %106 = vmatpush1.msra.mxu0 0.0
    %107 = vmatprep.subr.mxu0 0.0
    %108 = vmatpush1.msra.mxu0 0.0
    %109 = vmatprep.subr.mxu0 0.0
    %110 = vmatpush1.msra.mxu0 0.0
    %111 = vmatprep.subr.mxu0 0.0
    %112 = vmatpush1.msra.mxu0 0.0
    %113 = vmatprep.subr.mxu0 0.0
    %114 = vmatpush1.msra.mxu0 0.0
    %115 = vmatprep.subr.mxu0 0.0
    %116 = vmatpush1.msra.mxu0 0.0
    %117 = vmatprep.subr.mxu0 0.0
    %118 = vmatpush1.msra.mxu0 0.0
    %119 = vmatprep.mubr.f32.mxu0 0.0
    %120 = vmatmul.mubr.f32.gmra.mrb[0].mxu0 %v38
    %v121 = vpop.f32.mrb[0].mxu0
    %v122 = vadd.f32 0.0, %v121
    %v123 = vpop.f32.mrb[0].mxu0
    %124 = vdwg.mxu0
    %125 = vadd.xlane.f32.xlu0 %v38
    %v126 = vpop.xlane.xlu0 %125
    %v127 = vmul.f32 %v38, %v38
    %128 = vadd.xlane.f32.xlu0 %v127
    %v129 = vpop.xlane.xlu0 %128
    %v130 = vlaneseq
    %v131 = vand.u32 %v130, 127
    %vm132 = vcmp.eq.s32.totalorder %v131, 8
    %v133 = vsel %vm132, %v126, %v122
    %vm134 = vcmp.eq.s32.totalorder %v131, 9
    %v135 = vsel %vm134, %v129, %v133
    %136 = vst [vmem:[#allocation7] sm:$0xff] %v135
    // Predicated region
    $region18: #{tpu_custom_call.1} parent=1 // pred_check
      _
    $region19: #{tpu_custom_call.1} parent=1 // pred_check_branch
      %138 = sbr.rel (0) target = $region21
    $region20: #{tpu_custom_call.1} parent=1 // pred_region
      %s140 = ssub.s32 128, 32
      %141 = vsyncadd [#allocation4], %s140
      %s142 = sshll.u32 [#allocation7], 4
      %s143 = int_to_ptr.vmem [resolvable:$true] %s142
      %148 = dma.vmem_to_hbm [thread:$0]  %s143, 32, %s2, [#allocation4], 32, 32, 2
    $region21: #{tpu_custom_call.1} parent=1 // pred_fallthru
      _
    // Predicated region
    $region22: #{tpu_custom_call.1} parent=1 // pred_check
      _
    $region23: #{tpu_custom_call.1} parent=1 // pred_check_branch
      %150 = sbr.rel (0) target = $region25
    $region24: #{tpu_custom_call.1} parent=1 // pred_region
      %151 = dma.done [#allocation4], 128
    $region25: #{tpu_custom_call.1} parent=1 // pred_fallthru
      _
    %152 = vsyncpa [#allocation3], 1
    %153 = vsyncpa [#allocation6], 1
    %154 = vsyncpa [#allocation4], 1

</llo_original>
